<compile_context>
chip_gen: v7x
topology: tpu7x:2x2x1
jax: 0.10.0
libtpu: 0.0.40
codegen_flags: <defaults>
</compile_context>

<pallas_src>
import jax
import jax.numpy as jnp
from jax.experimental import pallas as pl
from jax.experimental.pallas import tpu as pltpu


HIDDEN = 16
OUT_FEATURES = 26
OUT_PAD = 128          # lane-dense output slab; sliced to 26 in the wrapper
BATCH_SUBLANES = 8     # pad batch to a multiple of 8 sublanes


def lstm_kernel(x_ref, wih_ref, bias_ref, whh_ref, wout_ref, bout_ref, out_ref):
    # x_ref:    (T, Bp, 1)   raw input sequence (time-major, padded batch)
    # wih_ref:  (1, 4H)      W_ih[:, 0], g-gate lanes pre-scaled by 2
    # bias_ref: (1, 4H)      b_ih + b_hh, g-gate lanes pre-scaled by 2
    # whh_ref:  (H, 4H)      W_hh^T, g-gate columns pre-scaled by 2
    # wout_ref: (H, OUT_PAD) W_out^T zero-padded to 128 lanes
    # bout_ref: (1, OUT_PAD)
    # out_ref:  (Bp, OUT_PAD)
    T = x_ref.shape[0]
    Bp = x_ref.shape[1]
    H = whh_ref.shape[0]

    # Hoist all loop-invariant loads out of the recurrence.
    whh = whh_ref[...]          # (H, 4H)
    wih = wih_ref[...]          # (1, 4H)
    bias = bias_ref[...]        # (1, 4H)
    x_all = x_ref[...]          # (T, Bp, 1)

    h = jnp.zeros((Bp, H), jnp.float32)
    c = jnp.zeros((Bp, H), jnp.float32)

    # Static unroll (T is a compile-time constant): one basic block, the LLO
    # scheduler overlaps the independent gate-x broadcasts with the serial
    # h @ W_hh chain.
    for t in range(T):
        # Input projection for this step: (Bp,1)*(1,4H) broadcast + bias.
        # Independent of h/c -> off the serial dependence chain.
        gx_t = x_all[t] * wih + bias                       # (Bp, 4H)

        # One MXU op per step on the serial chain.
        gates = gx_t + jnp.dot(h, whh, preferred_element_type=jnp.float32)

        # Single sigmoid over all four gates (g columns were pre-scaled by 2,
        # so tanh(z) = 2*sigmoid(2z) - 1 falls out of the same EUP push).
        sg = jax.nn.sigmoid(gates)                         # (Bp, 4H)
        i_g = sg[:, 0 * H:1 * H]
        f_g = sg[:, 1 * H:2 * H]
        g_g = 2.0 * sg[:, 2 * H:3 * H] - 1.0               # == tanh(orig g)
        o_g = sg[:, 3 * H:4 * H]

        c = f_g * c + i_g * g_g
        h = o_g * jnp.tanh(c)

    # Final Linear on the last timestep's hidden state; lane-dense store.
    out_ref[...] = (jnp.dot(h, wout_ref[...], preferred_element_type=jnp.float32)
                    + bout_ref[...])


def lstm_forward(x, params):
    """x: (B, T, 1) batch-first float32 (like PyTorch). Returns (B, 26)."""
    W_ih, W_hh, b_ih, b_hh, W_out, b_out = params
    B, T, _ = x.shape
    H = W_hh.shape[1]

    # --- one-time param prep (layout plumbing, not compute hoisting) ------
    # Fold the x2 of tanh(z) = 2*sigmoid(2z) - 1 into the g-gate parameters.
    scale = jnp.concatenate([jnp.ones(2 * H, jnp.float32),
                             2.0 * jnp.ones(H, jnp.float32),
                             jnp.ones(H, jnp.float32)])            # (4H,)
    wih_row = (W_ih[:, 0] * scale)[None, :].astype(jnp.float32)    # (1, 4H)
    bias = ((b_ih + b_hh) * scale)[None, :].astype(jnp.float32)    # (1, 4H)
    whh_t = (W_hh.T * scale[None, :]).astype(jnp.float32)          # (H, 4H)

    # Pad the output Linear to 128 lanes for an unmasked lane-dense store.
    wout_t = jnp.zeros((H, OUT_PAD), jnp.float32).at[:, :OUT_FEATURES].set(
        W_out.T.astype(jnp.float32))
    bo = jnp.zeros((1, OUT_PAD), jnp.float32).at[0, :OUT_FEATURES].set(
        b_out.astype(jnp.float32))

    # Pad batch to a multiple of 8 sublanes (B=2 would leave 75% of every
    # vreg empty); time-major so x_ref[t] is one contiguous (Bp, 1) tile.
    B_pad = max(BATCH_SUBLANES, ((B + BATCH_SUBLANES - 1) // BATCH_SUBLANES)
                * BATCH_SUBLANES)
    x_tb = jnp.transpose(x.astype(jnp.float32), (1, 0, 2))          # (T, B, 1)
    x_pad = jnp.zeros((T, B_pad, 1), jnp.float32).at[:, :B, :].set(x_tb)

    vmem_spec = pl.BlockSpec(memory_space=pltpu.MemorySpace.VMEM)
    out_pad = pl.pallas_call(
        lstm_kernel,
        out_shape=jax.ShapeDtypeStruct((B_pad, OUT_PAD), jnp.float32),
        in_specs=[vmem_spec] * 6,
        out_specs=vmem_spec,
    )(x_pad, wih_row, bias, whh_t, wout_t, bo)

    return out_pad[:B, :OUT_FEATURES]


def lstm_reference(x, params):
    """Pure-JAX reference matching PyTorch nn.LSTM + Linear semantics."""
    W_ih, W_hh, b_ih, b_hh, W_out, b_out = params
    B, T, _ = x.shape
    H = W_hh.shape[1]
    h = jnp.zeros((B, H), jnp.float32)
    c = jnp.zeros((B, H), jnp.float32)
    for t in range(T):
        x_t = x[:, t, :]
        gates = x_t @ W_ih.T + h @ W_hh.T + b_ih + b_hh
        i_g = jax.nn.sigmoid(gates[:, 0 * H:1 * H])
        f_g = jax.nn.sigmoid(gates[:, 1 * H:2 * H])
        g_g = jnp.tanh(gates[:, 2 * H:3 * H])
        o_g = jax.nn.sigmoid(gates[:, 3 * H:4 * H])
        c = f_g * c + i_g * g_g
        h = o_g * jnp.tanh(c)
    return h @ W_out.T + b_out


def init_params(key, input_size=1, hidden=HIDDEN, out_features=OUT_FEATURES):
    # Deterministic synthetic init (uniform +-1/sqrt(H), like PyTorch defaults).
    k = 1.0 / jnp.sqrt(hidden)
    keys = jax.random.split(key, 6)
    W_ih = jax.random.uniform(keys[0], (4 * hidden, input_size), jnp.float32, -k, k)
    W_hh = jax.random.uniform(keys[1], (4 * hidden, hidden), jnp.float32, -k, k)
    b_ih = jax.random.uniform(keys[2], (4 * hidden,), jnp.float32, -k, k)
    b_hh = jax.random.uniform(keys[3], (4 * hidden,), jnp.float32, -k, k)
    W_out = jax.random.uniform(keys[4], (out_features, hidden), jnp.float32, -k, k)
    b_out = jax.random.uniform(keys[5], (out_features,), jnp.float32, -k, k)
    return (W_ih, W_hh, b_ih, b_hh, W_out, b_out)


if __name__ == "__main__":
    key = jax.random.PRNGKey(0)
    k_x, k_p = jax.random.split(key)

    B, T = 2, 8
    x = jax.random.normal(k_x, (B, T, 1), jnp.float32)   # batch-first like PyTorch
    params = init_params(k_p)

    out = lstm_forward(x, params)
    out = jax.block_until_ready(out)

    ref = lstm_reference(x, params)
    assert out.shape == (B, OUT_FEATURES)
    assert jnp.allclose(out, ref, atol=1e-4, rtol=1e-4), "mismatch vs reference"

    print("KERNEL_OK")
</pallas_src>

<mosaic_0001>
module attributes {stable_mosaic.version = 11 : i64} {
  func.func @lstm_kernel(%arg0: memref<8x8x1xf32, #tpu.memory_space<vmem>>, %arg1: memref<1x64xf32, #tpu.memory_space<vmem>>, %arg2: memref<1x64xf32, #tpu.memory_space<vmem>>, %arg3: memref<16x64xf32, #tpu.memory_space<vmem>>, %arg4: memref<16x128xf32, #tpu.memory_space<vmem>>, %arg5: memref<1x128xf32, #tpu.memory_space<vmem>>, %arg6: memref<8x128xf32, #tpu.memory_space<vmem>>) attributes {dimension_semantics = [], scalar_prefetch = 0 : i64, scratch_operands = 0 : i64, tpu.core_type = #tpu.core_type<tc>} {
    %c0 = arith.constant 0 : index
    %c0_0 = arith.constant 0 : index
    %0 = vector.load %arg3[%c0, %c0_0] : memref<16x64xf32, #tpu.memory_space<vmem>>, vector<16x64xf32>
    %c0_1 = arith.constant 0 : index
    %c0_2 = arith.constant 0 : index
    %1 = vector.load %arg1[%c0_1, %c0_2] : memref<1x64xf32, #tpu.memory_space<vmem>>, vector<1x64xf32>
    %c0_3 = arith.constant 0 : index
    %c0_4 = arith.constant 0 : index
    %2 = vector.load %arg2[%c0_3, %c0_4] : memref<1x64xf32, #tpu.memory_space<vmem>>, vector<1x64xf32>
    %c0_5 = arith.constant 0 : index
    %c0_6 = arith.constant 0 : index
    %c0_7 = arith.constant 0 : index
    %3 = vector.load %arg0[%c0_5, %c0_6, %c0_7] : memref<8x8x1xf32, #tpu.memory_space<vmem>>, vector<8x8x1xf32>
    %cst = arith.constant 0.000000e+00 : f32
    %4 = vector.broadcast %cst : f32 to vector<8x16xf32>
    %cst_8 = arith.constant 0.000000e+00 : f32
    %5 = vector.broadcast %cst_8 : f32 to vector<8x16xf32>
    %6 = vector.extract_strided_slice %3 {offsets = [0, 0, 0], sizes = [1, 8, 1], strides = [1, 1, 1]} : vector<8x8x1xf32> to vector<1x8x1xf32>
    %7 = vector.shape_cast %6 : vector<1x8x1xf32> to vector<8x1xf32>
    %8 = vector.broadcast %7 : vector<8x1xf32> to vector<8x64xf32>
    %9 = vector.broadcast %1 : vector<1x64xf32> to vector<8x64xf32>
    %10 = arith.mulf %8, %9 : vector<8x64xf32>
    %11 = vector.broadcast %2 : vector<1x64xf32> to vector<8x64xf32>
    %12 = arith.addf %10, %11 : vector<8x64xf32>
    %cst_9 = arith.constant dense<0.000000e+00> : vector<8x64xf32>
    %13 = tpu.matmul %4, %0, %cst_9 {dimension_numbers = #tpu.dot_dimension_numbers<[1], [0], [0], [1], [0, 0, 1, 1], [], []>} : vector<8x16xf32>, vector<16x64xf32>, vector<8x64xf32> -> vector<8x64xf32>
    %14 = arith.addf %12, %13 : vector<8x64xf32>
    %15 = arith.negf %14 : vector<8x64xf32>
    %16 = math.exp %15 : vector<8x64xf32>
    %cst_10 = arith.constant 1.000000e+00 : f32
    %17 = vector.broadcast %cst_10 : f32 to vector<8x64xf32>
    %18 = arith.addf %17, %16 : vector<8x64xf32>
    %19 = arith.divf %17, %18 : vector<8x64xf32>
    %20 = vector.extract_strided_slice %19 {offsets = [0, 0], sizes = [8, 16], strides = [1, 1]} : vector<8x64xf32> to vector<8x16xf32>
    %21 = vector.extract_strided_slice %19 {offsets = [0, 16], sizes = [8, 16], strides = [1, 1]} : vector<8x64xf32> to vector<8x16xf32>
    %22 = vector.extract_strided_slice %19 {offsets = [0, 32], sizes = [8, 16], strides = [1, 1]} : vector<8x64xf32> to vector<8x16xf32>
    %cst_11 = arith.constant 2.000000e+00 : f32
    %23 = vector.broadcast %cst_11 : f32 to vector<8x16xf32>
    %24 = arith.mulf %23, %22 : vector<8x16xf32>
    %cst_12 = arith.constant 1.000000e+00 : f32
    %25 = vector.broadcast %cst_12 : f32 to vector<8x16xf32>
    %26 = arith.subf %24, %25 : vector<8x16xf32>
    %27 = vector.extract_strided_slice %19 {offsets = [0, 48], sizes = [8, 16], strides = [1, 1]} : vector<8x64xf32> to vector<8x16xf32>
    %28 = arith.mulf %21, %5 : vector<8x16xf32>
    %29 = arith.mulf %20, %26 : vector<8x16xf32>
    %30 = arith.addf %28, %29 : vector<8x16xf32>
    %31 = math.tanh %30 : vector<8x16xf32>
    %32 = arith.mulf %27, %31 : vector<8x16xf32>
    %33 = vector.extract_strided_slice %3 {offsets = [1, 0, 0], sizes = [1, 8, 1], strides = [1, 1, 1]} : vector<8x8x1xf32> to vector<1x8x1xf32>
    %34 = vector.shape_cast %33 : vector<1x8x1xf32> to vector<8x1xf32>
    %35 = vector.broadcast %34 : vector<8x1xf32> to vector<8x64xf32>
    %36 = vector.broadcast %1 : vector<1x64xf32> to vector<8x64xf32>
    %37 = arith.mulf %35, %36 : vector<8x64xf32>
    %38 = vector.broadcast %2 : vector<1x64xf32> to vector<8x64xf32>
    %39 = arith.addf %37, %38 : vector<8x64xf32>
    %cst_13 = arith.constant dense<0.000000e+00> : vector<8x64xf32>
    %40 = tpu.matmul %32, %0, %cst_13 {dimension_numbers = #tpu.dot_dimension_numbers<[1], [0], [0], [1], [0, 0, 1, 1], [], []>} : vector<8x16xf32>, vector<16x64xf32>, vector<8x64xf32> -> vector<8x64xf32>
    %41 = arith.addf %39, %40 : vector<8x64xf32>
    %42 = arith.negf %41 : vector<8x64xf32>
    %43 = math.exp %42 : vector<8x64xf32>
    %cst_14 = arith.constant 1.000000e+00 : f32
    %44 = vector.broadcast %cst_14 : f32 to vector<8x64xf32>
    %45 = arith.addf %44, %43 : vector<8x64xf32>
    %46 = arith.divf %44, %45 : vector<8x64xf32>
    %47 = vector.extract_strided_slice %46 {offsets = [0, 0], sizes = [8, 16], strides = [1, 1]} : vector<8x64xf32> to vector<8x16xf32>
    %48 = vector.extract_strided_slice %46 {offsets = [0, 16], sizes = [8, 16], strides = [1, 1]} : vector<8x64xf32> to vector<8x16xf32>
    %49 = vector.extract_strided_slice %46 {offsets = [0, 32], sizes = [8, 16], strides = [1, 1]} : vector<8x64xf32> to vector<8x16xf32>
    %cst_15 = arith.constant 2.000000e+00 : f32
    %50 = vector.broadcast %cst_15 : f32 to vector<8x16xf32>
    %51 = arith.mulf %50, %49 : vector<8x16xf32>
    %cst_16 = arith.constant 1.000000e+00 : f32
    %52 = vector.broadcast %cst_16 : f32 to vector<8x16xf32>
    %53 = arith.subf %51, %52 : vector<8x16xf32>
    %54 = vector.extract_strided_slice %46 {offsets = [0, 48], sizes = [8, 16], strides = [1, 1]} : vector<8x64xf32> to vector<8x16xf32>
    %55 = arith.mulf %48, %30 : vector<8x16xf32>
    %56 = arith.mulf %47, %53 : vector<8x16xf32>
    %57 = arith.addf %55, %56 : vector<8x16xf32>
    %58 = math.tanh %57 : vector<8x16xf32>
    %59 = arith.mulf %54, %58 : vector<8x16xf32>
    %60 = vector.extract_strided_slice %3 {offsets = [2, 0, 0], sizes = [1, 8, 1], strides = [1, 1, 1]} : vector<8x8x1xf32> to vector<1x8x1xf32>
    %61 = vector.shape_cast %60 : vector<1x8x1xf32> to vector<8x1xf32>
    %62 = vector.broadcast %61 : vector<8x1xf32> to vector<8x64xf32>
    %63 = vector.broadcast %1 : vector<1x64xf32> to vector<8x64xf32>
    %64 = arith.mulf %62, %63 : vector<8x64xf32>
    %65 = vector.broadcast %2 : vector<1x64xf32> to vector<8x64xf32>
    %66 = arith.addf %64, %65 : vector<8x64xf32>
    %cst_17 = arith.constant dense<0.000000e+00> : vector<8x64xf32>
    %67 = tpu.matmul %59, %0, %cst_17 {dimension_numbers = #tpu.dot_dimension_numbers<[1], [0], [0], [1], [0, 0, 1, 1], [], []>} : vector<8x16xf32>, vector<16x64xf32>, vector<8x64xf32> -> vector<8x64xf32>
    %68 = arith.addf %66, %67 : vector<8x64xf32>
    %69 = arith.negf %68 : vector<8x64xf32>
    %70 = math.exp %69 : vector<8x64xf32>
    %cst_18 = arith.constant 1.000000e+00 : f32
    %71 = vector.broadcast %cst_18 : f32 to vector<8x64xf32>
    %72 = arith.addf %71, %70 : vector<8x64xf32>
    %73 = arith.divf %71, %72 : vector<8x64xf32>
    %74 = vector.extract_strided_slice %73 {offsets = [0, 0], sizes = [8, 16], strides = [1, 1]} : vector<8x64xf32> to vector<8x16xf32>
    %75 = vector.extract_strided_slice %73 {offsets = [0, 16], sizes = [8, 16], strides = [1, 1]} : vector<8x64xf32> to vector<8x16xf32>
    %76 = vector.extract_strided_slice %73 {offsets = [0, 32], sizes = [8, 16], strides = [1, 1]} : vector<8x64xf32> to vector<8x16xf32>
    %cst_19 = arith.constant 2.000000e+00 : f32
    %77 = vector.broadcast %cst_19 : f32 to vector<8x16xf32>
    %78 = arith.mulf %77, %76 : vector<8x16xf32>
    %cst_20 = arith.constant 1.000000e+00 : f32
    %79 = vector.broadcast %cst_20 : f32 to vector<8x16xf32>
    %80 = arith.subf %78, %79 : vector<8x16xf32>
    %81 = vector.extract_strided_slice %73 {offsets = [0, 48], sizes = [8, 16], strides = [1, 1]} : vector<8x64xf32> to vector<8x16xf32>
    %82 = arith.mulf %75, %57 : vector<8x16xf32>
    %83 = arith.mulf %74, %80 : vector<8x16xf32>
    %84 = arith.addf %82, %83 : vector<8x16xf32>
    %85 = math.tanh %84 : vector<8x16xf32>
    %86 = arith.mulf %81, %85 : vector<8x16xf32>
    %87 = vector.extract_strided_slice %3 {offsets = [3, 0, 0], sizes = [1, 8, 1], strides = [1, 1, 1]} : vector<8x8x1xf32> to vector<1x8x1xf32>
    %88 = vector.shape_cast %87 : vector<1x8x1xf32> to vector<8x1xf32>
    %89 = vector.broadcast %88 : vector<8x1xf32> to vector<8x64xf32>
    %90 = vector.broadcast %1 : vector<1x64xf32> to vector<8x64xf32>
    %91 = arith.mulf %89, %90 : vector<8x64xf32>
    %92 = vector.broadcast %2 : vector<1x64xf32> to vector<8x64xf32>
    %93 = arith.addf %91, %92 : vector<8x64xf32>
    %cst_21 = arith.constant dense<0.000000e+00> : vector<8x64xf32>
    %94 = tpu.matmul %86, %0, %cst_21 {dimension_numbers = #tpu.dot_dimension_numbers<[1], [0], [0], [1], [0, 0, 1, 1], [], []>} : vector<8x16xf32>, vector<16x64xf32>, vector<8x64xf32> -> vector<8x64xf32>
    %95 = arith.addf %93, %94 : vector<8x64xf32>
    %96 = arith.negf %95 : vector<8x64xf32>
    %97 = math.exp %96 : vector<8x64xf32>
    %cst_22 = arith.constant 1.000000e+00 : f32
    %98 = vector.broadcast %cst_22 : f32 to vector<8x64xf32>
    %99 = arith.addf %98, %97 : vector<8x64xf32>
    %100 = arith.divf %98, %99 : vector<8x64xf32>
    %101 = vector.extract_strided_slice %100 {offsets = [0, 0], sizes = [8, 16], strides = [1, 1]} : vector<8x64xf32> to vector<8x16xf32>
    %102 = vector.extract_strided_slice %100 {offsets = [0, 16], sizes = [8, 16], strides = [1, 1]} : vector<8x64xf32> to vector<8x16xf32>
    %103 = vector.extract_strided_slice %100 {offsets = [0, 32], sizes = [8, 16], strides = [1, 1]} : vector<8x64xf32> to vector<8x16xf32>
    %cst_23 = arith.constant 2.000000e+00 : f32
    %104 = vector.broadcast %cst_23 : f32 to vector<8x16xf32>
    %105 = arith.mulf %104, %103 : vector<8x16xf32>
    %cst_24 = arith.constant 1.000000e+00 : f32
    %106 = vector.broadcast %cst_24 : f32 to vector<8x16xf32>
    %107 = arith.subf %105, %106 : vector<8x16xf32>
    %108 = vector.extract_strided_slice %100 {offsets = [0, 48], sizes = [8, 16], strides = [1, 1]} : vector<8x64xf32> to vector<8x16xf32>
    %109 = arith.mulf %102, %84 : vector<8x16xf32>
    %110 = arith.mulf %101, %107 : vector<8x16xf32>
    %111 = arith.addf %109, %110 : vector<8x16xf32>
    %112 = math.tanh %111 : vector<8x16xf32>
    %113 = arith.mulf %108, %112 : vector<8x16xf32>
    %114 = vector.extract_strided_slice %3 {offsets = [4, 0, 0], sizes = [1, 8, 1], strides = [1, 1, 1]} : vector<8x8x1xf32> to vector<1x8x1xf32>
    %115 = vector.shape_cast %114 : vector<1x8x1xf32> to vector<8x1xf32>
    %116 = vector.broadcast %115 : vector<8x1xf32> to vector<8x64xf32>
    %117 = vector.broadcast %1 : vector<1x64xf32> to vector<8x64xf32>
    %118 = arith.mulf %116, %117 : vector<8x64xf32>
    %119 = vector.broadcast %2 : vector<1x64xf32> to vector<8x64xf32>
    %120 = arith.addf %118, %119 : vector<8x64xf32>
    %cst_25 = arith.constant dense<0.000000e+00> : vector<8x64xf32>
    %121 = tpu.matmul %113, %0, %cst_25 {dimension_numbers = #tpu.dot_dimension_numbers<[1], [0], [0], [1], [0, 0, 1, 1], [], []>} : vector<8x16xf32>, vector<16x64xf32>, vector<8x64xf32> -> vector<8x64xf32>
    %122 = arith.addf %120, %121 : vector<8x64xf32>
    %123 = arith.negf %122 : vector<8x64xf32>
    %124 = math.exp %123 : vector<8x64xf32>
    %cst_26 = arith.constant 1.000000e+00 : f32
    %125 = vector.broadcast %cst_26 : f32 to vector<8x64xf32>
    %126 = arith.addf %125, %124 : vector<8x64xf32>
    %127 = arith.divf %125, %126 : vector<8x64xf32>
    %128 = vector.extract_strided_slice %127 {offsets = [0, 0], sizes = [8, 16], strides = [1, 1]} : vector<8x64xf32> to vector<8x16xf32>
    %129 = vector.extract_strided_slice %127 {offsets = [0, 16], sizes = [8, 16], strides = [1, 1]} : vector<8x64xf32> to vector<8x16xf32>
    %130 = vector.extract_strided_slice %127 {offsets = [0, 32], sizes = [8, 16], strides = [1, 1]} : vector<8x64xf32> to vector<8x16xf32>
    %cst_27 = arith.constant 2.000000e+00 : f32
    %131 = vector.broadcast %cst_27 : f32 to vector<8x16xf32>
    %132 = arith.mulf %131, %130 : vector<8x16xf32>
    %cst_28 = arith.constant 1.000000e+00 : f32
    %133 = vector.broadcast %cst_28 : f32 to vector<8x16xf32>
    %134 = arith.subf %132, %133 : vector<8x16xf32>
    %135 = vector.extract_strided_slice %127 {offsets = [0, 48], sizes = [8, 16], strides = [1, 1]} : vector<8x64xf32> to vector<8x16xf32>
    %136 = arith.mulf %129, %111 : vector<8x16xf32>
    %137 = arith.mulf %128, %134 : vector<8x16xf32>
    %138 = arith.addf %136, %137 : vector<8x16xf32>
    %139 = math.tanh %138 : vector<8x16xf32>
    %140 = arith.mulf %135, %139 : vector<8x16xf32>
    %141 = vector.extract_strided_slice %3 {offsets = [5, 0, 0], sizes = [1, 8, 1], strides = [1, 1, 1]} : vector<8x8x1xf32> to vector<1x8x1xf32>
    %142 = vector.shape_cast %141 : vector<1x8x1xf32> to vector<8x1xf32>
    %143 = vector.broadcast %142 : vector<8x1xf32> to vector<8x64xf32>
    %144 = vector.broadcast %1 : vector<1x64xf32> to vector<8x64xf32>
    %145 = arith.mulf %143, %144 : vector<8x64xf32>
    %146 = vector.broadcast %2 : vector<1x64xf32> to vector<8x64xf32>
    %147 = arith.addf %145, %146 : vector<8x64xf32>
    %cst_29 = arith.constant dense<0.000000e+00> : vector<8x64xf32>
    %148 = tpu.matmul %140, %0, %cst_29 {dimension_numbers = #tpu.dot_dimension_numbers<[1], [0], [0], [1], [0, 0, 1, 1], [], []>} : vector<8x16xf32>, vector<16x64xf32>, vector<8x64xf32> -> vector<8x64xf32>
    %149 = arith.addf %147, %148 : vector<8x64xf32>
    %150 = arith.negf %149 : vector<8x64xf32>
    %151 = math.exp %150 : vector<8x64xf32>
    %cst_30 = arith.constant 1.000000e+00 : f32
    %152 = vector.broadcast %cst_30 : f32 to vector<8x64xf32>
    %153 = arith.addf %152, %151 : vector<8x64xf32>
    %154 = arith.divf %152, %153 : vector<8x64xf32>
    %155 = vector.extract_strided_slice %154 {offsets = [0, 0], sizes = [8, 16], strides = [1, 1]} : vector<8x64xf32> to vector<8x16xf32>
    %156 = vector.extract_strided_slice %154 {offsets = [0, 16], sizes = [8, 16], strides = [1, 1]} : vector<8x64xf32> to vector<8x16xf32>
    %157 = vector.extract_strided_slice %154 {offsets = [0, 32], sizes = [8, 16], strides = [1, 1]} : vector<8x64xf32> to vector<8x16xf32>
    %cst_31 = arith.constant 2.000000e+00 : f32
    %158 = vector.broadcast %cst_31 : f32 to vector<8x16xf32>
    %159 = arith.mulf %158, %157 : vector<8x16xf32>
    %cst_32 = arith.constant 1.000000e+00 : f32
    %160 = vector.broadcast %cst_32 : f32 to vector<8x16xf32>
    %161 = arith.subf %159, %160 : vector<8x16xf32>
    %162 = vector.extract_strided_slice %154 {offsets = [0, 48], sizes = [8, 16], strides = [1, 1]} : vector<8x64xf32> to vector<8x16xf32>
    %163 = arith.mulf %156, %138 : vector<8x16xf32>
    %164 = arith.mulf %155, %161 : vector<8x16xf32>
    %165 = arith.addf %163, %164 : vector<8x16xf32>
    %166 = math.tanh %165 : vector<8x16xf32>
    %167 = arith.mulf %162, %166 : vector<8x16xf32>
    %168 = vector.extract_strided_slice %3 {offsets = [6, 0, 0], sizes = [1, 8, 1], strides = [1, 1, 1]} : vector<8x8x1xf32> to vector<1x8x1xf32>
    %169 = vector.shape_cast %168 : vector<1x8x1xf32> to vector<8x1xf32>
    %170 = vector.broadcast %169 : vector<8x1xf32> to vector<8x64xf32>
    %171 = vector.broadcast %1 : vector<1x64xf32> to vector<8x64xf32>
    %172 = arith.mulf %170, %171 : vector<8x64xf32>
    %173 = vector.broadcast %2 : vector<1x64xf32> to vector<8x64xf32>
    %174 = arith.addf %172, %173 : vector<8x64xf32>
    %cst_33 = arith.constant dense<0.000000e+00> : vector<8x64xf32>
    %175 = tpu.matmul %167, %0, %cst_33 {dimension_numbers = #tpu.dot_dimension_numbers<[1], [0], [0], [1], [0, 0, 1, 1], [], []>} : vector<8x16xf32>, vector<16x64xf32>, vector<8x64xf32> -> vector<8x64xf32>
    %176 = arith.addf %174, %175 : vector<8x64xf32>
    %177 = arith.negf %176 : vector<8x64xf32>
    %178 = math.exp %177 : vector<8x64xf32>
    %cst_34 = arith.constant 1.000000e+00 : f32
    %179 = vector.broadcast %cst_34 : f32 to vector<8x64xf32>
    %180 = arith.addf %179, %178 : vector<8x64xf32>
    %181 = arith.divf %179, %180 : vector<8x64xf32>
    %182 = vector.extract_strided_slice %181 {offsets = [0, 0], sizes = [8, 16], strides = [1, 1]} : vector<8x64xf32> to vector<8x16xf32>
    %183 = vector.extract_strided_slice %181 {offsets = [0, 16], sizes = [8, 16], strides = [1, 1]} : vector<8x64xf32> to vector<8x16xf32>
    %184 = vector.extract_strided_slice %181 {offsets = [0, 32], sizes = [8, 16], strides = [1, 1]} : vector<8x64xf32> to vector<8x16xf32>
    %cst_35 = arith.constant 2.000000e+00 : f32
    %185 = vector.broadcast %cst_35 : f32 to vector<8x16xf32>
    %186 = arith.mulf %185, %184 : vector<8x16xf32>
    %cst_36 = arith.constant 1.000000e+00 : f32
    %187 = vector.broadcast %cst_36 : f32 to vector<8x16xf32>
    %188 = arith.subf %186, %187 : vector<8x16xf32>
    %189 = vector.extract_strided_slice %181 {offsets = [0, 48], sizes = [8, 16], strides = [1, 1]} : vector<8x64xf32> to vector<8x16xf32>
    %190 = arith.mulf %183, %165 : vector<8x16xf32>
    %191 = arith.mulf %182, %188 : vector<8x16xf32>
    %192 = arith.addf %190, %191 : vector<8x16xf32>
    %193 = math.tanh %192 : vector<8x16xf32>
    %194 = arith.mulf %189, %193 : vector<8x16xf32>
    %195 = vector.extract_strided_slice %3 {offsets = [7, 0, 0], sizes = [1, 8, 1], strides = [1, 1, 1]} : vector<8x8x1xf32> to vector<1x8x1xf32>
    %196 = vector.shape_cast %195 : vector<1x8x1xf32> to vector<8x1xf32>
    %197 = vector.broadcast %196 : vector<8x1xf32> to vector<8x64xf32>
    %198 = vector.broadcast %1 : vector<1x64xf32> to vector<8x64xf32>
    %199 = arith.mulf %197, %198 : vector<8x64xf32>
    %200 = vector.broadcast %2 : vector<1x64xf32> to vector<8x64xf32>
    %201 = arith.addf %199, %200 : vector<8x64xf32>
    %cst_37 = arith.constant dense<0.000000e+00> : vector<8x64xf32>
    %202 = tpu.matmul %194, %0, %cst_37 {dimension_numbers = #tpu.dot_dimension_numbers<[1], [0], [0], [1], [0, 0, 1, 1], [], []>} : vector<8x16xf32>, vector<16x64xf32>, vector<8x64xf32> -> vector<8x64xf32>
    %203 = arith.addf %201, %202 : vector<8x64xf32>
    %204 = arith.negf %203 : vector<8x64xf32>
    %205 = math.exp %204 : vector<8x64xf32>
    %cst_38 = arith.constant 1.000000e+00 : f32
    %206 = vector.broadcast %cst_38 : f32 to vector<8x64xf32>
    %207 = arith.addf %206, %205 : vector<8x64xf32>
    %208 = arith.divf %206, %207 : vector<8x64xf32>
    %209 = vector.extract_strided_slice %208 {offsets = [0, 0], sizes = [8, 16], strides = [1, 1]} : vector<8x64xf32> to vector<8x16xf32>
    %210 = vector.extract_strided_slice %208 {offsets = [0, 16], sizes = [8, 16], strides = [1, 1]} : vector<8x64xf32> to vector<8x16xf32>
    %211 = vector.extract_strided_slice %208 {offsets = [0, 32], sizes = [8, 16], strides = [1, 1]} : vector<8x64xf32> to vector<8x16xf32>
    %cst_39 = arith.constant 2.000000e+00 : f32
    %212 = vector.broadcast %cst_39 : f32 to vector<8x16xf32>
    %213 = arith.mulf %212, %211 : vector<8x16xf32>
    %cst_40 = arith.constant 1.000000e+00 : f32
    %214 = vector.broadcast %cst_40 : f32 to vector<8x16xf32>
    %215 = arith.subf %213, %214 : vector<8x16xf32>
    %216 = vector.extract_strided_slice %208 {offsets = [0, 48], sizes = [8, 16], strides = [1, 1]} : vector<8x64xf32> to vector<8x16xf32>
    %217 = arith.mulf %210, %192 : vector<8x16xf32>
    %218 = arith.mulf %209, %215 : vector<8x16xf32>
    %219 = arith.addf %217, %218 : vector<8x16xf32>
    %220 = math.tanh %219 : vector<8x16xf32>
    %221 = arith.mulf %216, %220 : vector<8x16xf32>
    %c0_41 = arith.constant 0 : index
    %c0_42 = arith.constant 0 : index
    %222 = vector.load %arg4[%c0_41, %c0_42] : memref<16x128xf32, #tpu.memory_space<vmem>>, vector<16x128xf32>
    %cst_43 = arith.constant dense<0.000000e+00> : vector<8x128xf32>
    %223 = tpu.matmul %221, %222, %cst_43 {dimension_numbers = #tpu.dot_dimension_numbers<[1], [0], [0], [1], [0, 0, 1, 1], [], []>} : vector<8x16xf32>, vector<16x128xf32>, vector<8x128xf32> -> vector<8x128xf32>
    %c0_44 = arith.constant 0 : index
    %c0_45 = arith.constant 0 : index
    %224 = vector.load %arg5[%c0_44, %c0_45] : memref<1x128xf32, #tpu.memory_space<vmem>>, vector<1x128xf32>
    %225 = vector.broadcast %224 : vector<1x128xf32> to vector<8x128xf32>
    %226 = arith.addf %223, %225 : vector<8x128xf32>
    %c0_46 = arith.constant 0 : index
    %c0_47 = arith.constant 0 : index
    %227 = vector.load %arg6[%c0_46, %c0_47] : memref<8x128xf32, #tpu.memory_space<vmem>>, vector<8x128xf32>
    tpu.vector_store %arg6[%c0_46, %c0_47], %226 {strides = array<i32>} : memref<8x128xf32, #tpu.memory_space<vmem>>, vector<8x128xf32>,
    return
  }
}

</mosaic_0001>

<llo_original>
// kernel: tpu_custom_call.1
$region0: #{tpu_custom_call.1}
  #allocation0 [shape = 'u32[]', space=smem, size = 0x4, offset = 0x4, fixed_abs, tag = 'smem constant byte address 0x4 - core index']
  #allocation1 [shape = 'u32[144,128]{1,0:T(1,128)}', space=vmem, size = 0x12000, scoped, tag = 'internal scratch']
  %s0 = inlined_call_operand.vmem [shape: f32[8,8,1], index: 0, kind: input, shape index: {}]
  %s1 = inlined_call_operand.vmem [shape: f32[1,64], index: 1, kind: input, shape index: {}]
  %s2 = inlined_call_operand.vmem [shape: f32[1,64], index: 2, kind: input, shape index: {}]
  %s3 = inlined_call_operand.vmem [shape: f32[16,64], index: 3, kind: input, shape index: {}]
  %s4 = inlined_call_operand.vmem [shape: f32[16,128], index: 4, kind: input, shape index: {}]
  %s5 = inlined_call_operand.vmem [shape: f32[1,128], index: 5, kind: input, shape index: {}]
  %s6 = inlined_call_operand.hbm [shape: f32[8,128], index: 6, kind: output, shape index: {}]
  %s7 = sld [smem:[#allocation0]]
  $region34: #{tpu_custom_call.1} parent=0
    _
  %s9 = ssub.s32 1, %s7
  %s10 = scalar_select 0, %s9, %s7
  $region1: #{tpu_custom_call.1} parent=0
    #allocation2 [shape = 'u8[4096]{0}', space=vmem, size = 0x1000, scoped, tag = 'output window, operand 0, single buffered']
    #allocation3 [shape = 's32[1]{0}', space=sflag, size = 0x4, scoped, tag = 'scoped memory for tpu_custom_call.1']
    %11 = vsyncpa [#allocation3], 0
    // Predicated region
    $region2: #{tpu_custom_call.1} parent=1 // pred_check
      _
    $region3: #{tpu_custom_call.1} parent=1 // pred_check_branch
      %13 = sbr.rel (0) target = $region5
    $region4: #{tpu_custom_call.1} parent=1 // pred_region
      _
    $region5: #{tpu_custom_call.1} parent=1 // pred_fallthru
      _
    // Predicated region
    $region6: #{tpu_custom_call.1} parent=1 // pred_check
      _
    $region7: #{tpu_custom_call.1} parent=1 // pred_check_branch
      %15 = sbr.rel (0) target = $region9
    $region8: #{tpu_custom_call.1} parent=1 // pred_region
      _
    $region9: #{tpu_custom_call.1} parent=1 // pred_fallthru
      _
    // Predicated region
    $region10: #{tpu_custom_call.1} parent=1 // pred_check
      _
    $region11: #{tpu_custom_call.1} parent=1 // pred_check_branch
      %17 = sbr.rel (0) target = $region13
    $region12: #{tpu_custom_call.1} parent=1 // pred_region
      _
    $region13: #{tpu_custom_call.1} parent=1 // pred_fallthru
      _
    // Predicated region
    $region14: #{tpu_custom_call.1} parent=1 // pred_check
      _
    $region15: #{tpu_custom_call.1} parent=1 // pred_check_branch
      %19 = sbr.rel (0) target = $region17
    $region16: #{tpu_custom_call.1} parent=1 // pred_region
      _
    $region17: #{tpu_custom_call.1} parent=1 // pred_fallthru
      _
    // Predicated region
    $region18: #{tpu_custom_call.1} parent=1 // pred_check
      _
    $region19: #{tpu_custom_call.1} parent=1 // pred_check_branch
      %21 = sbr.rel (0) target = $region21
    $region20: #{tpu_custom_call.1} parent=1 // pred_region
      _
    $region21: #{tpu_custom_call.1} parent=1 // pred_fallthru
      _
    // Predicated region
    $region22: #{tpu_custom_call.1} parent=1 // pred_check
      _
    $region23: #{tpu_custom_call.1} parent=1 // pred_check_branch
      %23 = sbr.rel (0) target = $region25
    $region24: #{tpu_custom_call.1} parent=1 // pred_region
      _
    $region25: #{tpu_custom_call.1} parent=1 // pred_fallthru
      _
    %v24 = vld [vmem:[%s3] sm:$0xff]
    %v25 = vld [vmem:[%s3 + $0x8] sm:$0xff]
    %v26 = vld [vmem:[%s1] sm:$0x1]
    %v27 = vld [vmem:[%s2] sm:$0x1]
    %v28 = vld [vmem:[%s0] sm:$0xff]
    %v29 = vld [vmem:[%s0 + $0x8] sm:$0xff]
    %v30 = vld [vmem:[%s0 + $0x10] sm:$0xff]
    %v31 = vld [vmem:[%s0 + $0x18] sm:$0xff]
    %v32 = vld [vmem:[%s0 + $0x20] sm:$0xff]
    %v33 = vld [vmem:[%s0 + $0x28] sm:$0xff]
    %v34 = vld [vmem:[%s0 + $0x30] sm:$0xff]
    %v35 = vld [vmem:[%s0 + $0x38] sm:$0xff]
    %37 = vset.pattern.permute.xlu0 0
    %38 = vperm.xlu0 %37, %v28
    %v39 = vpop.permute.xlu0 %38
    %v42 = vlaneseq
    %v43 = vshrl.u32 %v42, 7
    %v44 = vsub.s32 0, %v43
    %v45 = vrot.slane %v26, %v44
    %v47 = vmul.f32 %v39, %v45
    %v49 = vlaneseq
    %v50 = vshrl.u32 %v49, 7
    %v51 = vsub.s32 0, %v50
    %v52 = vrot.slane %v27, %v51
    %v54 = vadd.f32 %v47, %v52
    %vm55 = vcmask 130048
    %v57 = vsel %vm55, 0.0, 0
    %59 = vmatprep.subr.mxu0 0.0
    %60 = vmatpush1.msra.mxu0 %v24
    %61 = vmatprep.subr.mxu0 0.0
    %62 = vmatpush1.msra.mxu0 %v25
    %63 = vmatprep.subr.mxu0 0.0
    %64 = vmatpush1.msra.mxu0 0.0
    %65 = vmatprep.subr.mxu0 0.0
    %66 = vmatpush1.msra.mxu0 0.0
    %67 = vmatprep.subr.mxu0 0.0
    %68 = vmatpush1.msra.mxu0 0.0
    %69 = vmatprep.subr.mxu0 0.0
    %70 = vmatpush1.msra.mxu0 0.0
    %71 = vmatprep.subr.mxu0 0.0
    %72 = vmatpush1.msra.mxu0 0.0
    %73 = vmatprep.subr.mxu0 0.0
    %74 = vmatpush1.msra.mxu0 0.0
    %75 = vmatprep.subr.mxu0 0.0
    %76 = vmatpush1.msra.mxu0 0.0
    %77 = vmatprep.subr.mxu0 0.0
    %78 = vmatpush1.msra.mxu0 0.0
    %79 = vmatprep.subr.mxu0 0.0
    %80 = vmatpush1.msra.mxu0 0.0
    %81 = vmatprep.subr.mxu0 0.0
    %82 = vmatpush1.msra.mxu0 0.0
    %83 = vmatprep.subr.mxu0 0.0
    %84 = vmatpush1.msra.mxu0 0.0
    %85 = vmatprep.subr.mxu0 0.0
    %86 = vmatpush1.msra.mxu0 0.0
    %87 = vmatprep.subr.mxu0 0.0
    %88 = vmatpush1.msra.mxu0 0.0
    %89 = vmatprep.subr.mxu0 0.0
    %90 = vmatpush1.msra.mxu0 0.0
    %91 = vmatprep.subr.mxu0 0.0
    %92 = vmatpush1.msra.mxu0 0.0
    %93 = vmatprep.subr.mxu0 0.0
    %94 = vmatpush1.msra.mxu0 0.0
    %95 = vmatprep.subr.mxu0 0.0
    %96 = vmatpush1.msra.mxu0 0.0
    %97 = vmatprep.subr.mxu0 0.0
    %98 = vmatpush1.msra.mxu0 0.0
    %99 = vmatprep.subr.mxu0 0.0
    %100 = vmatpush1.msra.mxu0 0.0
    %101 = vmatprep.subr.mxu0 0.0
    %102 = vmatpush1.msra.mxu0 0.0
    %103 = vmatprep.subr.mxu0 0.0
    %104 = vmatpush1.msra.mxu0 0.0
    %105 = vmatprep.subr.mxu0 0.0
    %106 = vmatpush1.msra.mxu0 0.0
    %107 = vmatprep.subr.mxu0 0.0
    %108 = vmatpush1.msra.mxu0 0.0
    %109 = vmatprep.subr.mxu0 0.0
    %110 = vmatpush1.msra.mxu0 0.0
    %111 = vmatprep.subr.mxu0 0.0
    %112 = vmatpush1.msra.mxu0 0.0
    %113 = vmatprep.subr.mxu0 0.0
    %114 = vmatpush1.msra.mxu0 0.0
    %115 = vmatprep.subr.mxu0 0.0
    %116 = vmatpush1.msra.mxu0 0.0
    %117 = vmatprep.subr.mxu0 0.0
    %118 = vmatpush1.msra.mxu0 0.0
    %119 = vmatprep.subr.mxu0 0.0
    %120 = vmatpush1.msra.mxu0 0.0
    %121 = vmatprep.subr.mxu0 0.0
    %122 = vmatpush1.msra.mxu0 0.0
    %123 = vmatprep.mubr.f32.mxu0 0.0
    %124 = vmatmul.mubr.f32.gmra.mrb[0].mxu0 %v57
    %v125 = vpop.f32.mrb[0].mxu0
    %v126 = vadd.f32 0.0, %v125
    %v127 = vpop.f32.mrb[0].mxu0
    %128 = vdwg.mxu0
    %v129 = vadd.f32 %v54, %v126
    %v130 = vxor.u32 %v129, 2147483648
    %v131 = vmul.f32 %v130, 1.442695
    %v132 = vpow.pop %v131
    %v133 = vadd.f32 %v132, 1.0
    %v134 = vrcp.pop %v133
    %v135 = vmul.f32 1.0, %v134
    %v136 = vmul.f32 %v135, 2.0
    %v137 = vsub.f32 %v136, 1.0
    %v138 = vmul.f32 %v135, 0.0
    %140 = vrot.lane.b32.xlu0 %v137, 96
    %v141 = vpop.permute.xlu0 %140
    %v143 = vmul.f32 %v135, %v141
    %145 = vrot.lane.b32.xlu0 %v143, 16
    %v146 = vpop.permute.xlu0 %145
    %v148 = vadd.f32 %v138, %v146
    %v149 = vtanh.pop %v148
    %151 = vrot.lane.b32.xlu0 %v149, 32
    %v152 = vpop.permute.xlu0 %151
    %v154 = vmul.f32 %v135, %v152
    %156 = vset.pattern.permute.xlu0 0
    %157 = vperm.xlu0 %156, %v29
    %v158 = vpop.permute.xlu0 %157
    %v160 = vmul.f32 %v158, %v45
    %v161 = vadd.f32 %v160, %v52
    %163 = vrot.lane.b32.xlu0 %v154, 80
    %v164 = vpop.permute.xlu0 %163
    %v165 = vsel %vm55, %v164, 0
    %167 = vmatprep.subr.mxu0 0.0
    %168 = vmatpush1.msra.mxu0 %v24
    %169 = vmatprep.subr.mxu0 0.0
    %170 = vmatpush1.msra.mxu0 %v25
    %171 = vmatprep.subr.mxu0 0.0
    %172 = vmatpush1.msra.mxu0 0.0
    %173 = vmatprep.subr.mxu0 0.0
    %174 = vmatpush1.msra.mxu0 0.0
    %175 = vmatprep.subr.mxu0 0.0
    %176 = vmatpush1.msra.mxu0 0.0
    %177 = vmatprep.subr.mxu0 0.0
    %178 = vmatpush1.msra.mxu0 0.0
    %179 = vmatprep.subr.mxu0 0.0
    %180 = vmatpush1.msra.mxu0 0.0
    %181 = vmatprep.subr.mxu0 0.0
    %182 = vmatpush1.msra.mxu0 0.0
    %183 = vmatprep.subr.mxu0 0.0
    %184 = vmatpush1.msra.mxu0 0.0
    %185 = vmatprep.subr.mxu0 0.0
    %186 = vmatpush1.msra.mxu0 0.0
    %187 = vmatprep.subr.mxu0 0.0
    %188 = vmatpush1.msra.mxu0 0.0
    %189 = vmatprep.subr.mxu0 0.0
    %190 = vmatpush1.msra.mxu0 0.0
    %191 = vmatprep.subr.mxu0 0.0
    %192 = vmatpush1.msra.mxu0 0.0
    %193 = vmatprep.subr.mxu0 0.0
    %194 = vmatpush1.msra.mxu0 0.0
    %195 = vmatprep.subr.mxu0 0.0
    %196 = vmatpush1.msra.mxu0 0.0
    %197 = vmatprep.subr.mxu0 0.0
    %198 = vmatpush1.msra.mxu0 0.0
    %199 = vmatprep.subr.mxu0 0.0
    %200 = vmatpush1.msra.mxu0 0.0
    %201 = vmatprep.subr.mxu0 0.0
    %202 = vmatpush1.msra.mxu0 0.0
    %203 = vmatprep.subr.mxu0 0.0
    %204 = vmatpush1.msra.mxu0 0.0
    %205 = vmatprep.subr.mxu0 0.0
    %206 = vmatpush1.msra.mxu0 0.0
    %207 = vmatprep.subr.mxu0 0.0
    %208 = vmatpush1.msra.mxu0 0.0
    %209 = vmatprep.subr.mxu0 0.0
    %210 = vmatpush1.msra.mxu0 0.0
    %211 = vmatprep.subr.mxu0 0.0
    %212 = vmatpush1.msra.mxu0 0.0
    %213 = vmatprep.subr.mxu0 0.0
    %214 = vmatpush1.msra.mxu0 0.0
    %215 = vmatprep.subr.mxu0 0.0
    %216 = vmatpush1.msra.mxu0 0.0
    %217 = vmatprep.subr.mxu0 0.0
    %218 = vmatpush1.msra.mxu0 0.0
    %219 = vmatprep.subr.mxu0 0.0
    %220 = vmatpush1.msra.mxu0 0.0
    %221 = vmatprep.subr.mxu0 0.0
    %222 = vmatpush1.msra.mxu0 0.0
    %223 = vmatprep.subr.mxu0 0.0
    %224 = vmatpush1.msra.mxu0 0.0
    %225 = vmatprep.subr.mxu0 0.0
    %226 = vmatpush1.msra.mxu0 0.0
    %227 = vmatprep.subr.mxu0 0.0
    %228 = vmatpush1.msra.mxu0 0.0
    %229 = vmatprep.subr.mxu0 0.0
    %230 = vmatpush1.msra.mxu0 0.0
    %231 = vmatprep.mubr.f32.mxu0 0.0
    %232 = vmatmul.mubr.f32.gmra.mrb[0].mxu0 %v165
    %v233 = vpop.f32.mrb[0].mxu0
    %v234 = vadd.f32 0.0, %v233
    %v235 = vpop.f32.mrb[0].mxu0
    %236 = vdwg.mxu0
    %v237 = vadd.f32 %v161, %v234
    %v238 = vxor.u32 %v237, 2147483648
    %v239 = vmul.f32 %v238, 1.442695
    %v240 = vpow.pop %v239
    %v241 = vadd.f32 %v240, 1.0
    %v242 = vrcp.pop %v241
    %v243 = vmul.f32 1.0, %v242
    %v244 = vmul.f32 %v243, 2.0
    %v245 = vsub.f32 %v244, 1.0
    %v246 = vmul.f32 %v243, %v148
    %248 = vrot.lane.b32.xlu0 %v245, 96
    %v249 = vpop.permute.xlu0 %248
    %v251 = vmul.f32 %v243, %v249
    %253 = vrot.lane.b32.xlu0 %v251, 16
    %v254 = vpop.permute.xlu0 %253
    %v256 = vadd.f32 %v246, %v254
    %v257 = vtanh.pop %v256
    %259 = vrot.lane.b32.xlu0 %v257, 32
    %v260 = vpop.permute.xlu0 %259
    %v262 = vmul.f32 %v243, %v260
    %264 = vset.pattern.permute.xlu0 0
    %265 = vperm.xlu0 %264, %v30
    %v266 = vpop.permute.xlu0 %265
    %v268 = vmul.f32 %v266, %v45
    %v269 = vadd.f32 %v268, %v52
    %271 = vrot.lane.b32.xlu0 %v262, 80
    %v272 = vpop.permute.xlu0 %271
    %v273 = vsel %vm55, %v272, 0
    %275 = vmatprep.subr.mxu0 0.0
    %276 = vmatpush1.msra.mxu0 %v24
    %277 = vmatprep.subr.mxu0 0.0
    %278 = vmatpush1.msra.mxu0 %v25
    %279 = vmatprep.subr.mxu0 0.0
    %280 = vmatpush1.msra.mxu0 0.0
    %281 = vmatprep.subr.mxu0 0.0
    %282 = vmatpush1.msra.mxu0 0.0
    %283 = vmatprep.subr.mxu0 0.0
    %284 = vmatpush1.msra.mxu0 0.0
    %285 = vmatprep.subr.mxu0 0.0
    %286 = vmatpush1.msra.mxu0 0.0
    %287 = vmatprep.subr.mxu0 0.0
    %288 = vmatpush1.msra.mxu0 0.0
    %289 = vmatprep.subr.mxu0 0.0
    %290 = vmatpush1.msra.mxu0 0.0
    %291 = vmatprep.subr.mxu0 0.0
    %292 = vmatpush1.msra.mxu0 0.0
    %293 = vmatprep.subr.mxu0 0.0
    %294 = vmatpush1.msra.mxu0 0.0
    %295 = vmatprep.subr.mxu0 0.0
    %296 = vmatpush1.msra.mxu0 0.0
    %297 = vmatprep.subr.mxu0 0.0
    %298 = vmatpush1.msra.mxu0 0.0
    %299 = vmatprep.subr.mxu0 0.0
    %300 = vmatpush1.msra.mxu0 0.0
    %301 = vmatprep.subr.mxu0 0.0
    %302 = vmatpush1.msra.mxu0 0.0
    %303 = vmatprep.subr.mxu0 0.0
    %304 = vmatpush1.msra.mxu0 0.0
    %305 = vmatprep.subr.mxu0 0.0
    %306 = vmatpush1.msra.mxu0 0.0
    %307 = vmatprep.subr.mxu0 0.0
    %308 = vmatpush1.msra.mxu0 0.0
    %309 = vmatprep.subr.mxu0 0.0
    %310 = vmatpush1.msra.mxu0 0.0
    %311 = vmatprep.subr.mxu0 0.0
    %312 = vmatpush1.msra.mxu0 0.0
    %313 = vmatprep.subr.mxu0 0.0
    %314 = vmatpush1.msra.mxu0 0.0
    %315 = vmatprep.subr.mxu0 0.0
    %316 = vmatpush1.msra.mxu0 0.0
    %317 = vmatprep.subr.mxu0 0.0
    %318 = vmatpush1.msra.mxu0 0.0
    %319 = vmatprep.subr.mxu0 0.0
    %320 = vmatpush1.msra.mxu0 0.0
    %321 = vmatprep.subr.mxu0 0.0
    %322 = vmatpush1.msra.mxu0 0.0
    %323 = vmatprep.subr.mxu0 0.0
    %324 = vmatpush1.msra.mxu0 0.0
    %325 = vmatprep.subr.mxu0 0.0
    %326 = vmatpush1.msra.mxu0 0.0
    %327 = vmatprep.subr.mxu0 0.0
    %328 = vmatpush1.msra.mxu0 0.0
    %329 = vmatprep.subr.mxu0 0.0
    %330 = vmatpush1.msra.mxu0 0.0
    %331 = vmatprep.subr.mxu0 0.0
    %332 = vmatpush1.msra.mxu0 0.0
    %333 = vmatprep.subr.mxu0 0.0
    %334 = vmatpush1.msra.mxu0 0.0
    %335 = vmatprep.subr.mxu0 0.0
    %336 = vmatpush1.msra.mxu0 0.0
    %337 = vmatprep.subr.mxu0 0.0
    %338 = vmatpush1.msra.mxu0 0.0
    %339 = vmatprep.mubr.f32.mxu0 0.0
    %340 = vmatmul.mubr.f32.gmra.mrb[0].mxu0 %v273
    %v341 = vpop.f32.mrb[0].mxu0
    %v342 = vadd.f32 0.0, %v341
    %v343 = vpop.f32.mrb[0].mxu0
    %344 = vdwg.mxu0
    %v345 = vadd.f32 %v269, %v342
    %v346 = vxor.u32 %v345, 2147483648
    %v347 = vmul.f32 %v346, 1.442695
    %v348 = vpow.pop %v347
    %v349 = vadd.f32 %v348, 1.0
    %v350 = vrcp.pop %v349
    %v351 = vmul.f32 1.0, %v350
    %v352 = vmul.f32 %v351, 2.0
    %v353 = vsub.f32 %v352, 1.0
    %v354 = vmul.f32 %v351, %v256
    %356 = vrot.lane.b32.xlu0 %v353, 96
    %v357 = vpop.permute.xlu0 %356
    %v359 = vmul.f32 %v351, %v357
    %361 = vrot.lane.b32.xlu0 %v359, 16
    %v362 = vpop.permute.xlu0 %361
    %v364 = vadd.f32 %v354, %v362
    %v365 = vtanh.pop %v364
    %367 = vrot.lane.b32.xlu0 %v365, 32
    %v368 = vpop.permute.xlu0 %367
    %v370 = vmul.f32 %v351, %v368
    %372 = vset.pattern.permute.xlu0 0
    %373 = vperm.xlu0 %372, %v31
    %v374 = vpop.permute.xlu0 %373
    %v376 = vmul.f32 %v374, %v45
    %v377 = vadd.f32 %v376, %v52
    %379 = vrot.lane.b32.xlu0 %v370, 80
    %v380 = vpop.permute.xlu0 %379
    %v381 = vsel %vm55, %v380, 0
    %383 = vmatprep.subr.mxu0 0.0
    %384 = vmatpush1.msra.mxu0 %v24
    %385 = vmatprep.subr.mxu0 0.0
    %386 = vmatpush1.msra.mxu0 %v25
    %387 = vmatprep.subr.mxu0 0.0
    %388 = vmatpush1.msra.mxu0 0.0
    %389 = vmatprep.subr.mxu0 0.0
    %390 = vmatpush1.msra.mxu0 0.0
    %391 = vmatprep.subr.mxu0 0.0
    %392 = vmatpush1.msra.mxu0 0.0
    %393 = vmatprep.subr.mxu0 0.0
    %394 = vmatpush1.msra.mxu0 0.0
    %395 = vmatprep.subr.mxu0 0.0
    %396 = vmatpush1.msra.mxu0 0.0
    %397 = vmatprep.subr.mxu0 0.0
    %398 = vmatpush1.msra.mxu0 0.0
    %399 = vmatprep.subr.mxu0 0.0
    %400 = vmatpush1.msra.mxu0 0.0
    %401 = vmatprep.subr.mxu0 0.0
    %402 = vmatpush1.msra.mxu0 0.0
    %403 = vmatprep.subr.mxu0 0.0
    %404 = vmatpush1.msra.mxu0 0.0
    %405 = vmatprep.subr.mxu0 0.0
    %406 = vmatpush1.msra.mxu0 0.0
    %407 = vmatprep.subr.mxu0 0.0
    %408 = vmatpush1.msra.mxu0 0.0
    %409 = vmatprep.subr.mxu0 0.0
    %410 = vmatpush1.msra.mxu0 0.0
    %411 = vmatprep.subr.mxu0 0.0
    %412 = vmatpush1.msra.mxu0 0.0
    %413 = vmatprep.subr.mxu0 0.0
    %414 = vmatpush1.msra.mxu0 0.0
    %415 = vmatprep.subr.mxu0 0.0
    %416 = vmatpush1.msra.mxu0 0.0
    %417 = vmatprep.subr.mxu0 0.0
    %418 = vmatpush1.msra.mxu0 0.0
    %419 = vmatprep.subr.mxu0 0.0
    %420 = vmatpush1.msra.mxu0 0.0
    %421 = vmatprep.subr.mxu0 0.0
    %422 = vmatpush1.msra.mxu0 0.0
    %423 = vmatprep.subr.mxu0 0.0
    %424 = vmatpush1.msra.mxu0 0.0
    %425 = vmatprep.subr.mxu0 0.0
    %426 = vmatpush1.msra.mxu0 0.0
    %427 = vmatprep.subr.mxu0 0.0
    %428 = vmatpush1.msra.mxu0 0.0
    %429 = vmatprep.subr.mxu0 0.0
    %430 = vmatpush1.msra.mxu0 0.0
    %431 = vmatprep.subr.mxu0 0.0
    %432 = vmatpush1.msra.mxu0 0.0
    %433 = vmatprep.subr.mxu0 0.0
    %434 = vmatpush1.msra.mxu0 0.0
    %435 = vmatprep.subr.mxu0 0.0
    %436 = vmatpush1.msra.mxu0 0.0
    %437 = vmatprep.subr.mxu0 0.0
    %438 = vmatpush1.msra.mxu0 0.0
    %439 = vmatprep.subr.mxu0 0.0
    %440 = vmatpush1.msra.mxu0 0.0
    %441 = vmatprep.subr.mxu0 0.0
    %442 = vmatpush1.msra.mxu0 0.0
    %443 = vmatprep.subr.mxu0 0.0
    %444 = vmatpush1.msra.mxu0 0.0
    %445 = vmatprep.subr.mxu0 0.0
    %446 = vmatpush1.msra.mxu0 0.0
    %447 = vmatprep.mubr.f32.mxu0 0.0
    %448 = vmatmul.mubr.f32.gmra.mrb[0].mxu0 %v381
    %v449 = vpop.f32.mrb[0].mxu0
    %v450 = vadd.f32 0.0, %v449
    %v451 = vpop.f32.mrb[0].mxu0
    %452 = vdwg.mxu0
    %v453 = vadd.f32 %v377, %v450
    %v454 = vxor.u32 %v453, 2147483648
    %v455 = vmul.f32 %v454, 1.442695
    %v456 = vpow.pop %v455
    %v457 = vadd.f32 %v456, 1.0
    %v458 = vrcp.pop %v457
    %v459 = vmul.f32 1.0, %v458
    %v460 = vmul.f32 %v459, 2.0
    %v461 = vsub.f32 %v460, 1.0
    %v462 = vmul.f32 %v459, %v364
    %464 = vrot.lane.b32.xlu0 %v461, 96
    %v465 = vpop.permute.xlu0 %464
    %v467 = vmul.f32 %v459, %v465
    %469 = vrot.lane.b32.xlu0 %v467, 16
    %v470 = vpop.permute.xlu0 %469
    %v472 = vadd.f32 %v462, %v470
    %v473 = vtanh.pop %v472
    %475 = vrot.lane.b32.xlu0 %v473, 32
    %v476 = vpop.permute.xlu0 %475
    %v478 = vmul.f32 %v459, %v476
    %480 = vset.pattern.permute.xlu0 0
    %481 = vperm.xlu0 %480, %v32
    %v482 = vpop.permute.xlu0 %481
    %v484 = vmul.f32 %v482, %v45
    %v485 = vadd.f32 %v484, %v52
    %487 = vrot.lane.b32.xlu0 %v478, 80
    %v488 = vpop.permute.xlu0 %487
    %v489 = vsel %vm55, %v488, 0
    %491 = vmatprep.subr.mxu0 0.0
    %492 = vmatpush1.msra.mxu0 %v24
    %493 = vmatprep.subr.mxu0 0.0
    %494 = vmatpush1.msra.mxu0 %v25
    %495 = vmatprep.subr.mxu0 0.0
    %496 = vmatpush1.msra.mxu0 0.0
    %497 = vmatprep.subr.mxu0 0.0
    %498 = vmatpush1.msra.mxu0 0.0
    %499 = vmatprep.subr.mxu0 0.0
    %500 = vmatpush1.msra.mxu0 0.0
    %501 = vmatprep.subr.mxu0 0.0
    %502 = vmatpush1.msra.mxu0 0.0
    %503 = vmatprep.subr.mxu0 0.0
    %504 = vmatpush1.msra.mxu0 0.0
    %505 = vmatprep.subr.mxu0 0.0
    %506 = vmatpush1.msra.mxu0 0.0
    %507 = vmatprep.subr.mxu0 0.0
    %508 = vmatpush1.msra.mxu0 0.0
    %509 = vmatprep.subr.mxu0 0.0
    %510 = vmatpush1.msra.mxu0 0.0
    %511 = vmatprep.subr.mxu0 0.0
    %512 = vmatpush1.msra.mxu0 0.0
    %513 = vmatprep.subr.mxu0 0.0
    %514 = vmatpush1.msra.mxu0 0.0
    %515 = vmatprep.subr.mxu0 0.0
    %516 = vmatpush1.msra.mxu0 0.0
    %517 = vmatprep.subr.mxu0 0.0
    %518 = vmatpush1.msra.mxu0 0.0
    %519 = vmatprep.subr.mxu0 0.0
    %520 = vmatpush1.msra.mxu0 0.0
    %521 = vmatprep.subr.mxu0 0.0
    %522 = vmatpush1.msra.mxu0 0.0
    %523 = vmatprep.subr.mxu0 0.0
    %524 = vmatpush1.msra.mxu0 0.0
    %525 = vmatprep.subr.mxu0 0.0
    %526 = vmatpush1.msra.mxu0 0.0
    %527 = vmatprep.subr.mxu0 0.0
    %528 = vmatpush1.msra.mxu0 0.0
    %529 = vmatprep.subr.mxu0 0.0
    %530 = vmatpush1.msra.mxu0 0.0
    %531 = vmatprep.subr.mxu0 0.0
    %532 = vmatpush1.msra.mxu0 0.0
    %533 = vmatprep.subr.mxu0 0.0
    %534 = vmatpush1.msra.mxu0 0.0
    %535 = vmatprep.subr.mxu0 0.0
    %536 = vmatpush1.msra.mxu0 0.0
    %537 = vmatprep.subr.mxu0 0.0
    %538 = vmatpush1.msra.mxu0 0.0
    %539 = vmatprep.subr.mxu0 0.0
    %540 = vmatpush1.msra.mxu0 0.0
    %541 = vmatprep.subr.mxu0 0.0
    %542 = vmatpush1.msra.mxu0 0.0
    %543 = vmatprep.subr.mxu0 0.0
    %544 = vmatpush1.msra.mxu0 0.0
    %545 = vmatprep.subr.mxu0 0.0
    %546 = vmatpush1.msra.mxu0 0.0
    %547 = vmatprep.subr.mxu0 0.0
    %548 = vmatpush1.msra.mxu0 0.0
    %549 = vmatprep.subr.mxu0 0.0
    %550 = vmatpush1.msra.mxu0 0.0
    %551 = vmatprep.subr.mxu0 0.0
    %552 = vmatpush1.msra.mxu0 0.0
    %553 = vmatprep.subr.mxu0 0.0
    %554 = vmatpush1.msra.mxu0 0.0
    %555 = vmatprep.mubr.f32.mxu0 0.0
    %556 = vmatmul.mubr.f32.gmra.mrb[0].mxu0 %v489
    %v557 = vpop.f32.mrb[0].mxu0
    %v558 = vadd.f32 0.0, %v557
    %v559 = vpop.f32.mrb[0].mxu0
    %560 = vdwg.mxu0
    %v561 = vadd.f32 %v485, %v558
    %v562 = vxor.u32 %v561, 2147483648
    %v563 = vmul.f32 %v562, 1.442695
    %v564 = vpow.pop %v563
    %v565 = vadd.f32 %v564, 1.0
    %v566 = vrcp.pop %v565
    %v567 = vmul.f32 1.0, %v566
    %v568 = vmul.f32 %v567, 2.0
    %v569 = vsub.f32 %v568, 1.0
    %v570 = vmul.f32 %v567, %v472
    %572 = vrot.lane.b32.xlu0 %v569, 96
    %v573 = vpop.permute.xlu0 %572
    %v575 = vmul.f32 %v567, %v573
    %577 = vrot.lane.b32.xlu0 %v575, 16
    %v578 = vpop.permute.xlu0 %577
    %v580 = vadd.f32 %v570, %v578
    %v581 = vtanh.pop %v580
    %583 = vrot.lane.b32.xlu0 %v581, 32
    %v584 = vpop.permute.xlu0 %583
    %v586 = vmul.f32 %v567, %v584
    %588 = vset.pattern.permute.xlu0 0
    %589 = vperm.xlu0 %588, %v33
    %v590 = vpop.permute.xlu0 %589
    %v592 = vmul.f32 %v590, %v45
    %v593 = vadd.f32 %v592, %v52
    %595 = vrot.lane.b32.xlu0 %v586, 80
    %v596 = vpop.permute.xlu0 %595
    %v597 = vsel %vm55, %v596, 0
    %599 = vmatprep.subr.mxu0 0.0
    %600 = vmatpush1.msra.mxu0 %v24
    %601 = vmatprep.subr.mxu0 0.0
    %602 = vmatpush1.msra.mxu0 %v25
    %603 = vmatprep.subr.mxu0 0.0
    %604 = vmatpush1.msra.mxu0 0.0
    %605 = vmatprep.subr.mxu0 0.0
    %606 = vmatpush1.msra.mxu0 0.0
    %607 = vmatprep.subr.mxu0 0.0
    %608 = vmatpush1.msra.mxu0 0.0
    %609 = vmatprep.subr.mxu0 0.0
    %610 = vmatpush1.msra.mxu0 0.0
    %611 = vmatprep.subr.mxu0 0.0
    %612 = vmatpush1.msra.mxu0 0.0
    %613 = vmatprep.subr.mxu0 0.0
    %614 = vmatpush1.msra.mxu0 0.0
    %615 = vmatprep.subr.mxu0 0.0
    %616 = vmatpush1.msra.mxu0 0.0
    %617 = vmatprep.subr.mxu0 0.0
    %618 = vmatpush1.msra.mxu0 0.0
    %619 = vmatprep.subr.mxu0 0.0
    %620 = vmatpush1.msra.mxu0 0.0
    %621 = vmatprep.subr.mxu0 0.0
    %622 = vmatpush1.msra.mxu0 0.0
    %623 = vmatprep.subr.mxu0 0.0
    %624 = vmatpush1.msra.mxu0 0.0
    %625 = vmatprep.subr.mxu0 0.0
    %626 = vmatpush1.msra.mxu0 0.0
    %627 = vmatprep.subr.mxu0 0.0
    %628 = vmatpush1.msra.mxu0 0.0
    %629 = vmatprep.subr.mxu0 0.0
    %630 = vmatpush1.msra.mxu0 0.0
    %631 = vmatprep.subr.mxu0 0.0
    %632 = vmatpush1.msra.mxu0 0.0
    %633 = vmatprep.subr.mxu0 0.0
    %634 = vmatpush1.msra.mxu0 0.0
    %635 = vmatprep.subr.mxu0 0.0
    %636 = vmatpush1.msra.mxu0 0.0
    %637 = vmatprep.subr.mxu0 0.0
    %638 = vmatpush1.msra.mxu0 0.0
    %639 = vmatprep.subr.mxu0 0.0
    %640 = vmatpush1.msra.mxu0 0.0
    %641 = vmatprep.subr.mxu0 0.0
    %642 = vmatpush1.msra.mxu0 0.0
    %643 = vmatprep.subr.mxu0 0.0
    %644 = vmatpush1.msra.mxu0 0.0
    %645 = vmatprep.subr.mxu0 0.0
    %646 = vmatpush1.msra.mxu0 0.0
    %647 = vmatprep.subr.mxu0 0.0
    %648 = vmatpush1.msra.mxu0 0.0
    %649 = vmatprep.subr.mxu0 0.0
    %650 = vmatpush1.msra.mxu0 0.0
    %651 = vmatprep.subr.mxu0 0.0
    %652 = vmatpush1.msra.mxu0 0.0
    %653 = vmatprep.subr.mxu0 0.0
    %654 = vmatpush1.msra.mxu0 0.0
    %655 = vmatprep.subr.mxu0 0.0
    %656 = vmatpush1.msra.mxu0 0.0
    %657 = vmatprep.subr.mxu0 0.0
    %658 = vmatpush1.msra.mxu0 0.0
    %659 = vmatprep.subr.mxu0 0.0
    %660 = vmatpush1.msra.mxu0 0.0
    %661 = vmatprep.subr.mxu0 0.0
    %662 = vmatpush1.msra.mxu0 0.0
    %663 = vmatprep.mubr.f32.mxu0 0.0
    %664 = vmatmul.mubr.f32.gmra.mrb[0].mxu0 %v597
    %v665 = vpop.f32.mrb[0].mxu0
    %v666 = vadd.f32 0.0, %v665
    %v667 = vpop.f32.mrb[0].mxu0
    %668 = vdwg.mxu0
    %v669 = vadd.f32 %v593, %v666
    %v670 = vxor.u32 %v669, 2147483648
    %v671 = vmul.f32 %v670, 1.442695
    %v672 = vpow.pop %v671
    %v673 = vadd.f32 %v672, 1.0
    %v674 = vrcp.pop %v673
    %v675 = vmul.f32 1.0, %v674
    %v676 = vmul.f32 %v675, 2.0
    %v677 = vsub.f32 %v676, 1.0
    %v678 = vmul.f32 %v675, %v580
    %680 = vrot.lane.b32.xlu0 %v677, 96
    %v681 = vpop.permute.xlu0 %680
    %v683 = vmul.f32 %v675, %v681
    %685 = vrot.lane.b32.xlu0 %v683, 16
    %v686 = vpop.permute.xlu0 %685
    %v688 = vadd.f32 %v678, %v686
    %v689 = vtanh.pop %v688
    %691 = vrot.lane.b32.xlu0 %v689, 32
    %v692 = vpop.permute.xlu0 %691
    %v694 = vmul.f32 %v675, %v692
    %696 = vset.pattern.permute.xlu0 0
    %697 = vperm.xlu0 %696, %v34
    %v698 = vpop.permute.xlu0 %697
    %v700 = vmul.f32 %v698, %v45
    %v701 = vadd.f32 %v700, %v52
    %703 = vrot.lane.b32.xlu0 %v694, 80
    %v704 = vpop.permute.xlu0 %703
    %v705 = vsel %vm55, %v704, 0
    %707 = vmatprep.subr.mxu0 0.0
    %708 = vmatpush1.msra.mxu0 %v24
    %709 = vmatprep.subr.mxu0 0.0
    %710 = vmatpush1.msra.mxu0 %v25
    %711 = vmatprep.subr.mxu0 0.0
    %712 = vmatpush1.msra.mxu0 0.0
    %713 = vmatprep.subr.mxu0 0.0
    %714 = vmatpush1.msra.mxu0 0.0
    %715 = vmatprep.subr.mxu0 0.0
    %716 = vmatpush1.msra.mxu0 0.0
    %717 = vmatprep.subr.mxu0 0.0
    %718 = vmatpush1.msra.mxu0 0.0
    %719 = vmatprep.subr.mxu0 0.0
    %720 = vmatpush1.msra.mxu0 0.0
    %721 = vmatprep.subr.mxu0 0.0
    %722 = vmatpush1.msra.mxu0 0.0
    %723 = vmatprep.subr.mxu0 0.0
    %724 = vmatpush1.msra.mxu0 0.0
    %725 = vmatprep.subr.mxu0 0.0
    %726 = vmatpush1.msra.mxu0 0.0
    %727 = vmatprep.subr.mxu0 0.0
    %728 = vmatpush1.msra.mxu0 0.0
    %729 = vmatprep.subr.mxu0 0.0
    %730 = vmatpush1.msra.mxu0 0.0
    %731 = vmatprep.subr.mxu0 0.0
    %732 = vmatpush1.msra.mxu0 0.0
    %733 = vmatprep.subr.mxu0 0.0
    %734 = vmatpush1.msra.mxu0 0.0
    %735 = vmatprep.subr.mxu0 0.0
    %736 = vmatpush1.msra.mxu0 0.0
    %737 = vmatprep.subr.mxu0 0.0
    %738 = vmatpush1.msra.mxu0 0.0
    %739 = vmatprep.subr.mxu0 0.0
    %740 = vmatpush1.msra.mxu0 0.0
    %741 = vmatprep.subr.mxu0 0.0
    %742 = vmatpush1.msra.mxu0 0.0
    %743 = vmatprep.subr.mxu0 0.0
    %744 = vmatpush1.msra.mxu0 0.0
    %745 = vmatprep.subr.mxu0 0.0
    %746 = vmatpush1.msra.mxu0 0.0
    %747 = vmatprep.subr.mxu0 0.0
    %748 = vmatpush1.msra.mxu0 0.0
    %749 = vmatprep.subr.mxu0 0.0
    %750 = vmatpush1.msra.mxu0 0.0
    %751 = vmatprep.subr.mxu0 0.0
    %752 = vmatpush1.msra.mxu0 0.0
    %753 = vmatprep.subr.mxu0 0.0
    %754 = vmatpush1.msra.mxu0 0.0
    %755 = vmatprep.subr.mxu0 0.0
    %756 = vmatpush1.msra.mxu0 0.0
    %757 = vmatprep.subr.mxu0 0.0
    %758 = vmatpush1.msra.mxu0 0.0
    %759 = vmatprep.subr.mxu0 0.0
    %760 = vmatpush1.msra.mxu0 0.0
    %761 = vmatprep.subr.mxu0 0.0
    %762 = vmatpush1.msra.mxu0 0.0
    %763 = vmatprep.subr.mxu0 0.0
    %764 = vmatpush1.msra.mxu0 0.0
    %765 = vmatprep.subr.mxu0 0.0
    %766 = vmatpush1.msra.mxu0 0.0
    %767 = vmatprep.subr.mxu0 0.0
    %768 = vmatpush1.msra.mxu0 0.0
    %769 = vmatprep.subr.mxu0 0.0
    %770 = vmatpush1.msra.mxu0 0.0
    %771 = vmatprep.mubr.f32.mxu0 0.0
    %772 = vmatmul.mubr.f32.gmra.mrb[0].mxu0 %v705
    %v773 = vpop.f32.mrb[0].mxu0
    %v774 = vadd.f32 0.0, %v773
    %v775 = vpop.f32.mrb[0].mxu0
    %776 = vdwg.mxu0
    %v777 = vadd.f32 %v701, %v774
    %v778 = vxor.u32 %v777, 2147483648
    %v779 = vmul.f32 %v778, 1.442695
    %v780 = vpow.pop %v779
    %v781 = vadd.f32 %v780, 1.0
    %v782 = vrcp.pop %v781
    %v783 = vmul.f32 1.0, %v782
    %v784 = vmul.f32 %v783, 2.0
    %v785 = vsub.f32 %v784, 1.0
    %v786 = vmul.f32 %v783, %v688
    %788 = vrot.lane.b32.xlu0 %v785, 96
    %v789 = vpop.permute.xlu0 %788
    %v791 = vmul.f32 %v783, %v789
    %793 = vrot.lane.b32.xlu0 %v791, 16
    %v794 = vpop.permute.xlu0 %793
    %v796 = vadd.f32 %v786, %v794
    %v797 = vtanh.pop %v796
    %799 = vrot.lane.b32.xlu0 %v797, 32
    %v800 = vpop.permute.xlu0 %799
    %v802 = vmul.f32 %v783, %v800
    %804 = vset.pattern.permute.xlu0 0
    %805 = vperm.xlu0 %804, %v35
    %v806 = vpop.permute.xlu0 %805
    %v808 = vmul.f32 %v806, %v45
    %v809 = vadd.f32 %v808, %v52
    %811 = vrot.lane.b32.xlu0 %v802, 80
    %v812 = vpop.permute.xlu0 %811
    %v813 = vsel %vm55, %v812, 0
    %815 = vmatprep.subr.mxu0 0.0
    %816 = vmatpush1.msra.mxu0 %v24
    %817 = vmatprep.subr.mxu0 0.0
    %818 = vmatpush1.msra.mxu0 %v25
    %819 = vmatprep.subr.mxu0 0.0
    %820 = vmatpush1.msra.mxu0 0.0
    %821 = vmatprep.subr.mxu0 0.0
    %822 = vmatpush1.msra.mxu0 0.0
    %823 = vmatprep.subr.mxu0 0.0
    %824 = vmatpush1.msra.mxu0 0.0
    %825 = vmatprep.subr.mxu0 0.0
    %826 = vmatpush1.msra.mxu0 0.0
    %827 = vmatprep.subr.mxu0 0.0
    %828 = vmatpush1.msra.mxu0 0.0
    %829 = vmatprep.subr.mxu0 0.0
    %830 = vmatpush1.msra.mxu0 0.0
    %831 = vmatprep.subr.mxu0 0.0
    %832 = vmatpush1.msra.mxu0 0.0
    %833 = vmatprep.subr.mxu0 0.0
    %834 = vmatpush1.msra.mxu0 0.0
    %835 = vmatprep.subr.mxu0 0.0
    %836 = vmatpush1.msra.mxu0 0.0
    %837 = vmatprep.subr.mxu0 0.0
    %838 = vmatpush1.msra.mxu0 0.0
    %839 = vmatprep.subr.mxu0 0.0
    %840 = vmatpush1.msra.mxu0 0.0
    %841 = vmatprep.subr.mxu0 0.0
    %842 = vmatpush1.msra.mxu0 0.0
    %843 = vmatprep.subr.mxu0 0.0
    %844 = vmatpush1.msra.mxu0 0.0
    %845 = vmatprep.subr.mxu0 0.0
    %846 = vmatpush1.msra.mxu0 0.0
    %847 = vmatprep.subr.mxu0 0.0
    %848 = vmatpush1.msra.mxu0 0.0
    %849 = vmatprep.subr.mxu0 0.0
    %850 = vmatpush1.msra.mxu0 0.0
    %851 = vmatprep.subr.mxu0 0.0
    %852 = vmatpush1.msra.mxu0 0.0
    %853 = vmatprep.subr.mxu0 0.0
    %854 = vmatpush1.msra.mxu0 0.0
    %855 = vmatprep.subr.mxu0 0.0
    %856 = vmatpush1.msra.mxu0 0.0
    %857 = vmatprep.subr.mxu0 0.0
    %858 = vmatpush1.msra.mxu0 0.0
    %859 = vmatprep.subr.mxu0 0.0
    %860 = vmatpush1.msra.mxu0 0.0
    %861 = vmatprep.subr.mxu0 0.0
    %862 = vmatpush1.msra.mxu0 0.0
    %863 = vmatprep.subr.mxu0 0.0
    %864 = vmatpush1.msra.mxu0 0.0
    %865 = vmatprep.subr.mxu0 0.0
    %866 = vmatpush1.msra.mxu0 0.0
    %867 = vmatprep.subr.mxu0 0.0
    %868 = vmatpush1.msra.mxu0 0.0
    %869 = vmatprep.subr.mxu0 0.0
    %870 = vmatpush1.msra.mxu0 0.0
    %871 = vmatprep.subr.mxu0 0.0
    %872 = vmatpush1.msra.mxu0 0.0
    %873 = vmatprep.subr.mxu0 0.0
    %874 = vmatpush1.msra.mxu0 0.0
    %875 = vmatprep.subr.mxu0 0.0
    %876 = vmatpush1.msra.mxu0 0.0
    %877 = vmatprep.subr.mxu0 0.0
    %878 = vmatpush1.msra.mxu0 0.0
    %879 = vmatprep.mubr.f32.mxu0 0.0
    %880 = vmatmul.mubr.f32.gmra.mrb[0].mxu0 %v813
    %v881 = vpop.f32.mrb[0].mxu0
    %v882 = vadd.f32 0.0, %v881
    %v883 = vpop.f32.mrb[0].mxu0
    %884 = vdwg.mxu0
    %v885 = vadd.f32 %v809, %v882
    %v886 = vxor.u32 %v885, 2147483648
    %v887 = vmul.f32 %v886, 1.442695
    %v888 = vpow.pop %v887
    %v889 = vadd.f32 %v888, 1.0
    %v890 = vrcp.pop %v889
    %v891 = vmul.f32 1.0, %v890
    %v892 = vmul.f32 %v891, 2.0
    %v893 = vsub.f32 %v892, 1.0
    %v894 = vmul.f32 %v891, %v796
    %896 = vrot.lane.b32.xlu0 %v893, 96
    %v897 = vpop.permute.xlu0 %896
    %v899 = vmul.f32 %v891, %v897
    %901 = vrot.lane.b32.xlu0 %v899, 16
    %v902 = vpop.permute.xlu0 %901
    %v904 = vadd.f32 %v894, %v902
    %v905 = vtanh.pop %v904
    %907 = vrot.lane.b32.xlu0 %v905, 32
    %v908 = vpop.permute.xlu0 %907
    %v910 = vmul.f32 %v891, %v908
    %v911 = vld [vmem:[%s4] sm:$0xff]
    %v912 = vld [vmem:[%s4 + $0x8] sm:$0xff]
    %v913 = vld [vmem:[%s5] sm:$0x1]
    %v915 = vlaneseq
    %v916 = vshrl.u32 %v915, 7
    %v917 = vsub.s32 0, %v916
    %v918 = vrot.slane %v913, %v917
    %921 = vrot.lane.b32.xlu0 %v910, 80
    %v922 = vpop.permute.xlu0 %921
    %v923 = vsel %vm55, %v922, 0
    %925 = vmatprep.subr.mxu0 0.0
    %926 = vmatpush1.msra.mxu0 %v911
    %927 = vmatprep.subr.mxu0 0.0
    %928 = vmatpush1.msra.mxu0 %v912
    %929 = vmatprep.subr.mxu0 0.0
    %930 = vmatpush1.msra.mxu0 0.0
    %931 = vmatprep.subr.mxu0 0.0
    %932 = vmatpush1.msra.mxu0 0.0
    %933 = vmatprep.subr.mxu0 0.0
    %934 = vmatpush1.msra.mxu0 0.0
    %935 = vmatprep.subr.mxu0 0.0
    %936 = vmatpush1.msra.mxu0 0.0
    %937 = vmatprep.subr.mxu0 0.0
    %938 = vmatpush1.msra.mxu0 0.0
    %939 = vmatprep.subr.mxu0 0.0
    %940 = vmatpush1.msra.mxu0 0.0
    %941 = vmatprep.subr.mxu0 0.0
    %942 = vmatpush1.msra.mxu0 0.0
    %943 = vmatprep.subr.mxu0 0.0
    %944 = vmatpush1.msra.mxu0 0.0
    %945 = vmatprep.subr.mxu0 0.0
    %946 = vmatpush1.msra.mxu0 0.0
    %947 = vmatprep.subr.mxu0 0.0
    %948 = vmatpush1.msra.mxu0 0.0
    %949 = vmatprep.subr.mxu0 0.0
    %950 = vmatpush1.msra.mxu0 0.0
    %951 = vmatprep.subr.mxu0 0.0
    %952 = vmatpush1.msra.mxu0 0.0
    %953 = vmatprep.subr.mxu0 0.0
    %954 = vmatpush1.msra.mxu0 0.0
    %955 = vmatprep.subr.mxu0 0.0
    %956 = vmatpush1.msra.mxu0 0.0
    %957 = vmatprep.subr.mxu0 0.0
    %958 = vmatpush1.msra.mxu0 0.0
    %959 = vmatprep.subr.mxu0 0.0
    %960 = vmatpush1.msra.mxu0 0.0
    %961 = vmatprep.subr.mxu0 0.0
    %962 = vmatpush1.msra.mxu0 0.0
    %963 = vmatprep.subr.mxu0 0.0
    %964 = vmatpush1.msra.mxu0 0.0
    %965 = vmatprep.subr.mxu0 0.0
    %966 = vmatpush1.msra.mxu0 0.0
    %967 = vmatprep.subr.mxu0 0.0
    %968 = vmatpush1.msra.mxu0 0.0
    %969 = vmatprep.subr.mxu0 0.0
    %970 = vmatpush1.msra.mxu0 0.0
    %971 = vmatprep.subr.mxu0 0.0
    %972 = vmatpush1.msra.mxu0 0.0
    %973 = vmatprep.subr.mxu0 0.0
    %974 = vmatpush1.msra.mxu0 0.0
    %975 = vmatprep.subr.mxu0 0.0
    %976 = vmatpush1.msra.mxu0 0.0
    %977 = vmatprep.subr.mxu0 0.0
    %978 = vmatpush1.msra.mxu0 0.0
    %979 = vmatprep.subr.mxu0 0.0
    %980 = vmatpush1.msra.mxu0 0.0
    %981 = vmatprep.subr.mxu0 0.0
    %982 = vmatpush1.msra.mxu0 0.0
    %983 = vmatprep.subr.mxu0 0.0
    %984 = vmatpush1.msra.mxu0 0.0
    %985 = vmatprep.subr.mxu0 0.0
    %986 = vmatpush1.msra.mxu0 0.0
    %987 = vmatprep.subr.mxu0 0.0
    %988 = vmatpush1.msra.mxu0 0.0
    %989 = vmatprep.mubr.f32.mxu0 0.0
    %990 = vmatmul.mubr.f32.gmra.mrb[0].mxu0 %v923
    %v991 = vpop.f32.mrb[0].mxu0
    %v992 = vadd.f32 %v918, %v991
    %v993 = vpop.f32.mrb[0].mxu0
    %994 = vdwg.mxu0
    %995 = vst [vmem:[#allocation2] sm:$0xff] %v992
    // Predicated region
    $region26: #{tpu_custom_call.1} parent=1 // pred_check
      _
    $region27: #{tpu_custom_call.1} parent=1 // pred_check_branch
      %997 = sbr.rel (0) target = $region29
    $region28: #{tpu_custom_call.1} parent=1 // pred_region
      %s999 = ssub.s32 128, 128
      %1000 = vsyncadd [#allocation3], %s999
      %s1002 = sshll.u32 [#allocation2], 4
      %s1003 = int_to_ptr.vmem [resolvable:$true] %s1002
      %1005 = dma.vmem_to_hbm [thread:$0]  %s1003, 128, %s6, [#allocation3]
    $region29: #{tpu_custom_call.1} parent=1 // pred_fallthru
      _
    // Predicated region
    $region30: #{tpu_custom_call.1} parent=1 // pred_check
      _
    $region31: #{tpu_custom_call.1} parent=1 // pred_check_branch
      %1007 = sbr.rel (0) target = $region33
    $region32: #{tpu_custom_call.1} parent=1 // pred_region
      %1008 = dma.done [#allocation3], 128
    $region33: #{tpu_custom_call.1} parent=1 // pred_fallthru
      _
    %1009 = vsyncpa [#allocation3], 1

</llo_original>
